<compile_context>
chip_gen: v5e
topology: v5e:2x2
jax: 0.10.0
libtpu: 0.0.40
codegen_flags: <defaults>
</compile_context>

<pallas_src>
import math

import jax
import jax.numpy as jnp
from jax.experimental import pallas as pl
from jax.experimental.pallas import tpu as pltpu


# ----------------------------- Pallas kernels -----------------------------


def embed_score_proj_kernel(x_ref, wet_ref, bias_ref, a_ref,
                            w1t_ref, b1_ref, w2t_ref, b2_ref,
                            ex_ref, proj_ref, score_ref):
    """Fused kernel over the folded [B*T, *] slab: value+positional embedding,
    rolling-variance score (block-diagonal operator), temporal-projection MLP."""
    # --- shared embedding: ex = x @ We^T + (be + pe), kept f32 (feeds both top_k) ---
    ex = jnp.dot(x_ref[...], wet_ref[...],
                 preferred_element_type=jnp.float32) + bias_ref[...]       # [M, d]
    ex_ref[...] = ex

    # --- rolling mean / variance score via block-diag kron(eye(B), A) [M, M].
    #     f32: the m2 - m^2 cancellation is precision sensitive (matches the torch
    #     conv-based formulation exactly, incl. partial-window counts). ---
    a = a_ref[...]
    ltrm = jnp.dot(a, ex, preferred_element_type=jnp.float32)              # rolling mean
    ltr2 = jnp.dot(a, ex * ex, preferred_element_type=jnp.float32)         # rolling mean of sq.
    var = ltr2 - ltrm * ltrm
    score_ref[...] = (jnp.sum(var, axis=-1, keepdims=True)
                      / (jnp.sum(ltrm, axis=-1, keepdims=True) + 1e-6))    # [M, 1]

    # --- temporal projection: sigmoid(Linear(GELU(Linear(ex)))), bf16 MXU / f32 acc.
    #     tanh-GELU (EUP) per perf review; small deviation from torch's exact erf. ---
    h = jnp.dot(ex.astype(jnp.bfloat16), w1t_ref[...],
                preferred_element_type=jnp.float32) + b1_ref[...]
    h = jax.nn.gelu(h, approximate=True)
    y = jnp.dot(h.astype(jnp.bfloat16), w2t_ref[...],
                preferred_element_type=jnp.float32) + b2_ref[...]
    proj_ref[...] = jax.nn.sigmoid(y)


def decode_freqproj_kernel(proj_ref, tmask_ref, tok_ref, exf_ref, tdm_ref, we_ref,
                           wf1_ref, bf1_ref, wf2_ref, bf2_ref,
                           tout_ref, fout_ref):
    """Fused kernel over the folded [B*T, *] slab: temporal mask-token select,
    two decode GEMMs against the same resident weight, lane-dense per-scalar
    frequency-projection MLP (unrolled hidden loop, tanh-GELU), frequency select."""
    # temporal: masked rows -> mask token, unmasked rows -> projection(ex)   (vsel)
    mask_t = tmask_ref[...] > 0.5                                          # [M, 1] bool
    masked_t = jnp.where(mask_t, tok_ref[...], proj_ref[...])              # [M, d]

    # two decode matmuls reuse the resident We block (no concatenate / slices)
    dec_t = jnp.dot(masked_t.astype(jnp.bfloat16), we_ref[...],
                    preferred_element_type=jnp.float32)                    # [M, c_in]
    tout_ref[...] = dec_t
    dec_f = jnp.dot(exf_ref[...].astype(jnp.bfloat16), we_ref[...],
                    preferred_element_type=jnp.float32)                    # [M, c_in]

    # frequency projection per scalar v: sigmoid(sum_k gelu(v*w1[k] + b1[k]) * w2[k] + b2)
    # lane-dense: v stays as the [M, c_in] slab; unrolled loop over hidden units with
    # scalar weights streamed from SMEM; tanh-GELU keeps the transcendental on the EUP.
    d_hidden = wf1_ref.shape[0]

    def body(k, acc):
        h = jax.nn.gelu(dec_f * wf1_ref[k] + bf1_ref[k], approximate=True)
        return acc + h * wf2_ref[k]

    acc = jax.lax.fori_loop(0, d_hidden, body, jnp.zeros_like(dec_f), unroll=8)
    proj_f = jax.nn.sigmoid(acc + bf2_ref[0])

    # time-domain-mask True -> keep decoded value, False -> frequency projection (vsel)
    mask_f = tdm_ref[...] > 0.5                                            # [M, 1] bool
    fout_ref[...] = jnp.where(mask_f, dec_f, proj_f)


# ----------------------------- model glue -----------------------------


def init_params(key, d_model, c_in):
    ks = jax.random.split(key, 10)

    def lin(kw, kb, out_f, in_f):
        bound = 1.0 / math.sqrt(in_f)
        w = jax.random.uniform(kw, (out_f, in_f), jnp.float32, -bound, bound)
        b = jax.random.uniform(kb, (out_f,), jnp.float32, -bound, bound)
        return w, b

    We, be = lin(ks[0], ks[1], d_model, c_in)        # emb.value_embedding
    W1, b1 = lin(ks[2], ks[3], d_model, d_model)     # temporal_projection[0]
    W2, b2 = lin(ks[4], ks[5], d_model, d_model)     # temporal_projection[2]
    Wf1, bf1 = lin(ks[6], ks[7], d_model, 1)         # frequency_projection[0]
    Wf2, bf2 = lin(ks[8], ks[9], 1, d_model)         # frequency_projection[2]
    return dict(
        We=We, be=be, W1=W1, b1=b1, W2=W2, b2=b2,
        Wf1=Wf1, bf1=bf1, Wf2=Wf2, bf2=bf2,
        temporal_mask_token=jnp.zeros((d_model,), jnp.float32),   # nn.Parameter zeros
        # frequency_mask_token is complex zeros (1, d, 1) -> value 0+0j used directly
    )


def temporal_frequency_masking(x, p, window_size, t_ratio, f_ratio):
    B, T, N, Fdim = x.shape
    c_in = N * Fdim
    d = p["We"].shape[0]
    M = B * T

    # positional embedding pe[:T]  (d_model even), folded together with be into one bias
    position = jnp.arange(T, dtype=jnp.float32)[:, None]
    div_term = jnp.exp(jnp.arange(0, d, 2, dtype=jnp.float32) * -(math.log(10000.0) / d))
    pe = jnp.zeros((T, d), jnp.float32)
    pe = pe.at[:, 0::2].set(jnp.sin(position * div_term))
    pe = pe.at[:, 1::2].set(jnp.cos(position * div_term))
    bias = jnp.tile(pe, (B, 1)) + p["be"][None, :]                          # [M, d]

    # block-diagonal causal rolling-mean operator kron(eye(B), A): [M, M] (4 KiB here)
    t_idx = jnp.arange(T)
    in_win = ((t_idx[None, :] <= t_idx[:, None])
              & (t_idx[None, :] >= t_idx[:, None] - (window_size - 1)))
    count = jnp.minimum(t_idx + 1, window_size).astype(jnp.float32)[:, None]
    A = in_win.astype(jnp.float32) / count                                  # [T, T]
    A_bd = jnp.kron(jnp.eye(B, dtype=jnp.float32), A)                       # [M, M]

    x2 = x.reshape(M, c_in)                                                 # batch folded into M

    WeT = p["We"].T                                   # f32: embedding feeds top_k decisions
    W1T_bf = p["W1"].T.astype(jnp.bfloat16)
    W2T_bf = p["W2"].T.astype(jnp.bfloat16)
    We_bf = p["We"].astype(jnp.bfloat16)

    def full(shape):
        return pl.BlockSpec(shape, lambda i: (0,) * len(shape))

    smem = pl.BlockSpec(memory_space=pltpu.MemorySpace.SMEM)

    # ------------- kernel 1: embedding + score + temporal-projection MLP -------------
    ex, proj, score2 = pl.pallas_call(
        embed_score_proj_kernel,
        grid=(1,),
        in_specs=[
            full((M, c_in)),            # x (folded)
            full((c_in, d)),            # We^T (f32)
            full((M, d)),               # be + positional embedding
            full((M, M)),               # block-diagonal rolling-mean operator
            full((d, d)),               # W1^T (bf16)
            full((1, d)),               # b1
            full((d, d)),               # W2^T (bf16)
            full((1, d)),               # b2
        ],
        out_specs=(
            full((M, d)),               # ex          (lane-dense, d=128)
            full((M, d)),               # projection  (lane-dense, d=128)
            full((M, 1)),               # score (single tiny masked store per call)
        ),
        out_shape=(
            jax.ShapeDtypeStruct((M, d), jnp.float32),
            jax.ShapeDtypeStruct((M, d), jnp.float32),
            jax.ShapeDtypeStruct((M, 1), jnp.float32),
        ),
        compiler_params=pltpu.CompilerParams(dimension_semantics=("arbitrary",)),
    )(x2, WeT, bias, A_bd, W1T_bf, p["b1"][None, :], W2T_bf, p["b2"][None, :])

    # ------------- temporal mask selection (top_k stays in XLA) -------------
    score = score2.reshape(B, T)
    num_mask_t = int(T * t_ratio)
    _, t_mask_idx = jax.lax.top_k(score, num_mask_t)                        # [B, num_mask_t]
    is_masked_t = jnp.any(t_idx[None, :, None] == t_mask_idx[:, None, :], axis=-1)
    tmask_f = is_masked_t.astype(jnp.float32).reshape(M, 1)

    # ------------- frequency mask selection (FFT stays in XLA) -------------
    ex3 = ex.reshape(B, T, d)
    Tf = T // 2 + 1
    cx = jnp.fft.rfft(ex3, axis=1)                                          # [B, Tf, d] complex
    day_mag = jnp.abs(cx).mean(axis=-1)                                     # [B, Tf]
    num_mask_f = int(T * f_ratio)
    _, f_mask_idx = jax.lax.top_k(-day_mag, num_mask_f)                     # lowest-magnitude bins
    is_masked_f = jnp.any(jnp.arange(Tf)[None, :, None] == f_mask_idx[:, None, :], axis=-1)

    masked_fft = jnp.where(is_masked_f[:, :, None], 0.0 + 0.0j, cx)         # freq mask token = 0
    masked_ex_f = jnp.fft.irfft(masked_fft, n=T, axis=1).astype(jnp.float32)  # [B, T, d]
    masked_ex_f2 = masked_ex_f.reshape(M, d)

    # time-domain mask (identical across channels); torch does .bool() (== '!= 0') on
    # the irfft of the 0/1 indicator — match that literally.
    tdm_sig = jnp.fft.irfft(is_masked_f.astype(jnp.float32), n=T, axis=1)   # [B, T]
    tdm_f = (tdm_sig != 0.0).astype(jnp.float32).reshape(M, 1)

    # ------------- kernel 2: decode GEMMs + frequency projection + selects -------------
    tout, fout = pl.pallas_call(
        decode_freqproj_kernel,
        grid=(1,),
        in_specs=[
            full((M, d)),               # temporal projection
            full((M, 1)),               # temporal mask (0/1 float)
            full((1, d)),               # temporal mask token
            full((M, d)),               # frequency-masked embedding
            full((M, 1)),               # time-domain mask (0/1 float)
            full((d, c_in)),            # We (decode weight, bf16)
            smem,                       # Wf1[:, 0]
            smem,                       # bf1
            smem,                       # Wf2[0, :]
            smem,                       # bf2
        ],
        out_specs=(
            full((M, c_in)),            # temporal_masked  (lane-dense, c_in=256)
            full((M, c_in)),            # frequency_masked (lane-dense, c_in=256)
        ),
        out_shape=(
            jax.ShapeDtypeStruct((M, c_in), jnp.float32),
            jax.ShapeDtypeStruct((M, c_in), jnp.float32),
        ),
        compiler_params=pltpu.CompilerParams(dimension_semantics=("arbitrary",)),
    )(proj, tmask_f, p["temporal_mask_token"][None, :], masked_ex_f2, tdm_f, We_bf,
      p["Wf1"][:, 0], p["bf1"], p["Wf2"][0, :], p["bf2"])

    temporal_masked_x = tout.reshape(B, T, N, Fdim)
    frequency_masked_x = fout.reshape(B, T, N, Fdim)
    return temporal_masked_x, t_mask_idx, frequency_masked_x, f_mask_idx


if __name__ == "__main__":
    # x: [B, T, N, F] with N * F == d_model * n_features (the module's c_in).
    # d_model=128 / c_in=256 keep every large kernel operand 128-lane dense.
    B, T = 2, 16
    d_model, n_features = 128, 2
    c_in = d_model * n_features          # 256
    N, Fdim = c_in // 2, 2               # x: [2, 16, 128, 2]
    window_size = 4
    t_ratio = f_ratio = 0.25

    key = jax.random.PRNGKey(0)
    kx, kp = jax.random.split(key)
    x = jax.random.normal(kx, (B, T, N, Fdim), jnp.float32)
    params = init_params(kp, d_model, c_in)

    outs = temporal_frequency_masking(x, params, window_size, t_ratio, f_ratio)
    outs = jax.block_until_ready(outs)
    tmx, tidx, fmx, fidx = outs

    assert tmx.shape == (B, T, N, Fdim) and tmx.dtype == jnp.float32
    assert fmx.shape == (B, T, N, Fdim) and fmx.dtype == jnp.float32
    assert tidx.shape == (B, int(T * t_ratio))
    assert fidx.shape == (B, int(T * f_ratio))
    assert bool(jnp.all(jnp.isfinite(tmx))) and bool(jnp.all(jnp.isfinite(fmx)))
    print("KERNEL_OK")
</pallas_src>

<mosaic_0001>
module attributes {stable_mosaic.version = 11 : i64} {
  func.func @embed_score_proj_kernel(%arg0: i32, %arg1: memref<32x256xf32, #tpu.memory_space<vmem>>, %arg2: memref<256x128xf32, #tpu.memory_space<vmem>>, %arg3: memref<32x128xf32, #tpu.memory_space<vmem>>, %arg4: memref<32x32xf32, #tpu.memory_space<vmem>>, %arg5: memref<128x128xbf16, #tpu.memory_space<vmem>>, %arg6: memref<1x128xf32, #tpu.memory_space<vmem>>, %arg7: memref<128x128xbf16, #tpu.memory_space<vmem>>, %arg8: memref<1x128xf32, #tpu.memory_space<vmem>>, %arg9: memref<32x128xf32, #tpu.memory_space<vmem>>, %arg10: memref<32x128xf32, #tpu.memory_space<vmem>>, %arg11: memref<32x1xf32, #tpu.memory_space<vmem>>) attributes {dimension_semantics = [#tpu.dimension_semantics<arbitrary>], iteration_bounds = array<i64: 1>, scalar_prefetch = 0 : i64, scratch_operands = 0 : i64, tpu.core_type = #tpu.core_type<tc>, window_params = [{pipeline_mode = #tpu.pipeline_mode<synchronous>, transform_indices = @transform_0, window_bounds = array<i64: 32, 256>}, {pipeline_mode = #tpu.pipeline_mode<synchronous>, transform_indices = @transform_1, window_bounds = array<i64: 256, 128>}, {pipeline_mode = #tpu.pipeline_mode<synchronous>, transform_indices = @transform_2, window_bounds = array<i64: 32, 128>}, {pipeline_mode = #tpu.pipeline_mode<synchronous>, transform_indices = @transform_3, window_bounds = array<i64: 32, 32>}, {pipeline_mode = #tpu.pipeline_mode<synchronous>, transform_indices = @transform_4, window_bounds = array<i64: 128, 128>}, {pipeline_mode = #tpu.pipeline_mode<synchronous>, transform_indices = @transform_5, window_bounds = array<i64: 1, 128>}, {pipeline_mode = #tpu.pipeline_mode<synchronous>, transform_indices = @transform_6, window_bounds = array<i64: 128, 128>}, {pipeline_mode = #tpu.pipeline_mode<synchronous>, transform_indices = @transform_7, window_bounds = array<i64: 1, 128>}, {pipeline_mode = #tpu.pipeline_mode<synchronous>, transform_indices = @transform_8, window_bounds = array<i64: 32, 128>}, {pipeline_mode = #tpu.pipeline_mode<synchronous>, transform_indices = @transform_9, window_bounds = array<i64: 32, 128>}, {pipeline_mode = #tpu.pipeline_mode<synchronous>, transform_indices = @transform_10, window_bounds = array<i64: 32, 1>}]} {
    %c0 = arith.constant 0 : index
    %c0_0 = arith.constant 0 : index
    %0 = vector.load %arg1[%c0, %c0_0] : memref<32x256xf32, #tpu.memory_space<vmem>>, vector<32x256xf32>
    %c0_1 = arith.constant 0 : index
    %c0_2 = arith.constant 0 : index
    %1 = vector.load %arg2[%c0_1, %c0_2] : memref<256x128xf32, #tpu.memory_space<vmem>>, vector<256x128xf32>
    %cst = arith.constant dense<0.000000e+00> : vector<32x128xf32>
    %2 = tpu.matmul %0, %1, %cst {dimension_numbers = #tpu.dot_dimension_numbers<[1], [0], [0], [1], [0, 0, 1, 1], [], []>} : vector<32x256xf32>, vector<256x128xf32>, vector<32x128xf32> -> vector<32x128xf32>
    %c0_3 = arith.constant 0 : index
    %c0_4 = arith.constant 0 : index
    %3 = vector.load %arg3[%c0_3, %c0_4] : memref<32x128xf32, #tpu.memory_space<vmem>>, vector<32x128xf32>
    %4 = arith.addf %2, %3 : vector<32x128xf32>
    %c0_5 = arith.constant 0 : index
    %c0_6 = arith.constant 0 : index
    %5 = vector.load %arg9[%c0_5, %c0_6] : memref<32x128xf32, #tpu.memory_space<vmem>>, vector<32x128xf32>
    tpu.vector_store %arg9[%c0_5, %c0_6], %4 {strides = array<i32>} : memref<32x128xf32, #tpu.memory_space<vmem>>, vector<32x128xf32>,
    %c0_7 = arith.constant 0 : index
    %c0_8 = arith.constant 0 : index
    %6 = vector.load %arg4[%c0_7, %c0_8] : memref<32x32xf32, #tpu.memory_space<vmem>>, vector<32x32xf32>
    %cst_9 = arith.constant dense<0.000000e+00> : vector<32x128xf32>
    %7 = tpu.matmul %6, %4, %cst_9 {dimension_numbers = #tpu.dot_dimension_numbers<[1], [0], [0], [1], [0, 0, 1, 1], [], []>} : vector<32x32xf32>, vector<32x128xf32>, vector<32x128xf32> -> vector<32x128xf32>
    %8 = arith.mulf %4, %4 : vector<32x128xf32>
    %cst_10 = arith.constant dense<0.000000e+00> : vector<32x128xf32>
    %9 = tpu.matmul %6, %8, %cst_10 {dimension_numbers = #tpu.dot_dimension_numbers<[1], [0], [0], [1], [0, 0, 1, 1], [], []>} : vector<32x32xf32>, vector<32x128xf32>, vector<32x128xf32> -> vector<32x128xf32>
    %10 = arith.mulf %7, %7 : vector<32x128xf32>
    %11 = arith.subf %9, %10 : vector<32x128xf32>
    %cst_11 = arith.constant dense<0.000000e+00> : vector<32xf32>
    %12 = vector.multi_reduction <add>, %11, %cst_11 [1] : vector<32x128xf32> to vector<32xf32>
    %13 = vector.shape_cast %12 : vector<32xf32> to vector<32x1xf32>
    %cst_12 = arith.constant dense<0.000000e+00> : vector<32xf32>
    %14 = vector.multi_reduction <add>, %7, %cst_12 [1] : vector<32x128xf32> to vector<32xf32>
    %15 = vector.shape_cast %14 : vector<32xf32> to vector<32x1xf32>
    %cst_13 = arith.constant 9.99999997E-7 : f32
    %16 = vector.broadcast %cst_13 : f32 to vector<32x1xf32>
    %17 = arith.addf %15, %16 : vector<32x1xf32>
    %18 = arith.divf %13, %17 : vector<32x1xf32>
    %c0_14 = arith.constant 0 : index
    %c0_15 = arith.constant 0 : index
    %19 = vector.load %arg11[%c0_14, %c0_15] : memref<32x1xf32, #tpu.memory_space<vmem>>, vector<32x1xf32>
    tpu.vector_store %arg11[%c0_14, %c0_15], %18 {strides = array<i32>} : memref<32x1xf32, #tpu.memory_space<vmem>>, vector<32x1xf32>,
    %20 = arith.truncf %4 : vector<32x128xf32> to vector<32x128xbf16>
    %c0_16 = arith.constant 0 : index
    %c0_17 = arith.constant 0 : index
    %21 = vector.load %arg5[%c0_16, %c0_17] : memref<128x128xbf16, #tpu.memory_space<vmem>>, vector<128x128xbf16>
    %cst_18 = arith.constant dense<0.000000e+00> : vector<32x128xf32>
    %22 = tpu.matmul %20, %21, %cst_18 {dimension_numbers = #tpu.dot_dimension_numbers<[1], [0], [0], [1], [0, 0, 1, 1], [], []>} : vector<32x128xbf16>, vector<128x128xbf16>, vector<32x128xf32> -> vector<32x128xf32>
    %c0_19 = arith.constant 0 : index
    %c0_20 = arith.constant 0 : index
    %23 = vector.load %arg6[%c0_19, %c0_20] : memref<1x128xf32, #tpu.memory_space<vmem>>, vector<1x128xf32>
    %24 = vector.broadcast %23 : vector<1x128xf32> to vector<32x128xf32>
    %25 = arith.addf %22, %24 : vector<32x128xf32>
    %26 = arith.mulf %25, %25 : vector<32x128xf32>
    %27 = arith.mulf %25, %26 : vector<32x128xf32>
    %cst_21 = arith.constant 4.471500e-02 : f32
    %28 = vector.broadcast %cst_21 : f32 to vector<32x128xf32>
    %29 = arith.mulf %28, %27 : vector<32x128xf32>
    %30 = arith.addf %25, %29 : vector<32x128xf32>
    %cst_22 = arith.constant 0.797884583 : f32
    %31 = vector.broadcast %cst_22 : f32 to vector<32x128xf32>
    %32 = arith.mulf %31, %30 : vector<32x128xf32>
    %33 = math.tanh %32 : vector<32x128xf32>
    %cst_23 = arith.constant 1.000000e+00 : f32
    %34 = vector.broadcast %cst_23 : f32 to vector<32x128xf32>
    %35 = arith.addf %34, %33 : vector<32x128xf32>
    %cst_24 = arith.constant 5.000000e-01 : f32
    %36 = vector.broadcast %cst_24 : f32 to vector<32x128xf32>
    %37 = arith.mulf %36, %35 : vector<32x128xf32>
    %38 = arith.mulf %25, %37 : vector<32x128xf32>
    %39 = arith.truncf %38 : vector<32x128xf32> to vector<32x128xbf16>
    %c0_25 = arith.constant 0 : index
    %c0_26 = arith.constant 0 : index
    %40 = vector.load %arg7[%c0_25, %c0_26] : memref<128x128xbf16, #tpu.memory_space<vmem>>, vector<128x128xbf16>
    %cst_27 = arith.constant dense<0.000000e+00> : vector<32x128xf32>
    %41 = tpu.matmul %39, %40, %cst_27 {dimension_numbers = #tpu.dot_dimension_numbers<[1], [0], [0], [1], [0, 0, 1, 1], [], []>} : vector<32x128xbf16>, vector<128x128xbf16>, vector<32x128xf32> -> vector<32x128xf32>
    %c0_28 = arith.constant 0 : index
    %c0_29 = arith.constant 0 : index
    %42 = vector.load %arg8[%c0_28, %c0_29] : memref<1x128xf32, #tpu.memory_space<vmem>>, vector<1x128xf32>
    %43 = vector.broadcast %42 : vector<1x128xf32> to vector<32x128xf32>
    %44 = arith.addf %41, %43 : vector<32x128xf32>
    %45 = arith.negf %44 : vector<32x128xf32>
    %46 = math.exp %45 : vector<32x128xf32>
    %cst_30 = arith.constant 1.000000e+00 : f32
    %47 = vector.broadcast %cst_30 : f32 to vector<32x128xf32>
    %48 = arith.addf %47, %46 : vector<32x128xf32>
    %49 = arith.divf %47, %48 : vector<32x128xf32>
    %c0_31 = arith.constant 0 : index
    %c0_32 = arith.constant 0 : index
    %50 = vector.load %arg10[%c0_31, %c0_32] : memref<32x128xf32, #tpu.memory_space<vmem>>, vector<32x128xf32>
    tpu.vector_store %arg10[%c0_31, %c0_32], %49 {strides = array<i32>} : memref<32x128xf32, #tpu.memory_space<vmem>>, vector<32x128xf32>,
    return
  }
  func.func @transform_0(%arg0: i32) -> (i32, i32) {
    %c0_i32 = arith.constant 0 : i32
    %c0_i32_0 = arith.constant 0 : i32
    %c0_i32_1 = arith.constant 0 : i32
    return %c0_i32, %c0_i32_0 : i32, i32
  }
  func.func @transform_1(%arg0: i32) -> (i32, i32) {
    %c0_i32 = arith.constant 0 : i32
    %c0_i32_0 = arith.constant 0 : i32
    %c0_i32_1 = arith.constant 0 : i32
    return %c0_i32, %c0_i32_0 : i32, i32
  }
  func.func @transform_2(%arg0: i32) -> (i32, i32) {
    %c0_i32 = arith.constant 0 : i32
    %c0_i32_0 = arith.constant 0 : i32
    %c0_i32_1 = arith.constant 0 : i32
    return %c0_i32, %c0_i32_0 : i32, i32
  }
  func.func @transform_3(%arg0: i32) -> (i32, i32) {
    %c0_i32 = arith.constant 0 : i32
    %c0_i32_0 = arith.constant 0 : i32
    %c0_i32_1 = arith.constant 0 : i32
    return %c0_i32, %c0_i32_0 : i32, i32
  }
  func.func @transform_4(%arg0: i32) -> (i32, i32) {
    %c0_i32 = arith.constant 0 : i32
    %c0_i32_0 = arith.constant 0 : i32
    %c0_i32_1 = arith.constant 0 : i32
    return %c0_i32, %c0_i32_0 : i32, i32
  }
  func.func @transform_5(%arg0: i32) -> (i32, i32) {
    %c0_i32 = arith.constant 0 : i32
    %c0_i32_0 = arith.constant 0 : i32
    %c0_i32_1 = arith.constant 0 : i32
    return %c0_i32, %c0_i32_0 : i32, i32
  }
  func.func @transform_6(%arg0: i32) -> (i32, i32) {
    %c0_i32 = arith.constant 0 : i32
    %c0_i32_0 = arith.constant 0 : i32
    %c0_i32_1 = arith.constant 0 : i32
    return %c0_i32, %c0_i32_0 : i32, i32
  }
  func.func @transform_7(%arg0: i32) -> (i32, i32) {
    %c0_i32 = arith.constant 0 : i32
    %c0_i32_0 = arith.constant 0 : i32
    %c0_i32_1 = arith.constant 0 : i32
    return %c0_i32, %c0_i32_0 : i32, i32
  }
  func.func @transform_8(%arg0: i32) -> (i32, i32) {
    %c0_i32 = arith.constant 0 : i32
    %c0_i32_0 = arith.constant 0 : i32
    %c0_i32_1 = arith.constant 0 : i32
    return %c0_i32, %c0_i32_0 : i32, i32
  }
  func.func @transform_9(%arg0: i32) -> (i32, i32) {
    %c0_i32 = arith.constant 0 : i32
    %c0_i32_0 = arith.constant 0 : i32
    %c0_i32_1 = arith.constant 0 : i32
    return %c0_i32, %c0_i32_0 : i32, i32
  }
  func.func @transform_10(%arg0: i32) -> (i32, i32) {
    %c0_i32 = arith.constant 0 : i32
    %c0_i32_0 = arith.constant 0 : i32
    %c0_i32_1 = arith.constant 0 : i32
    return %c0_i32, %c0_i32_0 : i32, i32
  }
}

</mosaic_0001>

<llo_original>
// kernel: tpu_custom_call.1
$region0: #{tpu_custom_call.1}
  #allocation0 [shape = 'u32[]', space=smem, size = 0x4, offset = 0x4, fixed_abs, tag = 'smem constant byte address 0x4 - core index']
  #allocation1 [shape = 'u32[72,128]{1,0:T(1,128)}', space=vmem, size = 0x9000, scoped, tag = 'internal scratch']
  %s0 = inlined_call_operand.hbm [shape: f32[32,256], index: 0, kind: input, shape index: {}]
  %s1 = inlined_call_operand.hbm [shape: f32[256,128], index: 1, kind: input, shape index: {}]
  %s2 = inlined_call_operand.hbm [shape: f32[32,128], index: 2, kind: input, shape index: {}]
  %s3 = inlined_call_operand.hbm [shape: f32[32,32], index: 3, kind: input, shape index: {}]
  %s4 = inlined_call_operand.hbm [shape: bf16[128,128], index: 4, kind: input, shape index: {}]
  %s5 = inlined_call_operand.vmem [shape: f32[1,128], index: 5, kind: input, shape index: {}]
  %s6 = inlined_call_operand.hbm [shape: bf16[128,128], index: 6, kind: input, shape index: {}]
  %s7 = inlined_call_operand.vmem [shape: f32[1,128], index: 7, kind: input, shape index: {}]
  %s8 = inlined_call_operand.hbm [shape: f32[32,128], index: 8, kind: output, shape index: {0}]
  %s9 = inlined_call_operand.hbm [shape: f32[32,128], index: 9, kind: output, shape index: {1}]
  %s10 = inlined_call_operand.vmem [shape: f32[32,1], index: 10, kind: output, shape index: {2}]
  %11 = xla_tuple %s8, %s9, %s10
  %s12 = sld [smem:[#allocation0]]
  $region82: #{tpu_custom_call.1} parent=0
    _
  %s14 = ssub.s32 1, %s12
  %s15 = scalar_select 0, %s14, %s12
  $region1: #{tpu_custom_call.1} parent=0
    #allocation2 [shape = 'u8[32768]{0}', space=vmem, size = 0x8000, scoped, tag = 'input window, operand 0, single buffered']
    #allocation3 [shape = 's32[1]{0}', space=sflag, size = 0x4, scoped, tag = 'scoped memory for tpu_custom_call.1']
    #allocation4 [shape = 's32[1]{0}', space=sflag, size = 0x4, scoped, tag = 'scoped memory for tpu_custom_call.1']
    #allocation5 [shape = 'u8[131072]{0}', space=vmem, size = 0x20000, scoped, tag = 'input window, operand 1, single buffered']
    #allocation6 [shape = 's32[1]{0}', space=sflag, size = 0x4, scoped, tag = 'scoped memory for tpu_custom_call.1']
    #allocation7 [shape = 'u8[16384]{0}', space=vmem, size = 0x4000, scoped, tag = 'input window, operand 2, single buffered']
    #allocation8 [shape = 'u8[16384]{0}', space=vmem, size = 0x4000, scoped, tag = 'input window, operand 3, single buffered']
    #allocation9 [shape = 's32[1]{0}', space=sflag, size = 0x4, scoped, tag = 'scoped memory for tpu_custom_call.1']
    #allocation10 [shape = 'u8[32768]{0}', space=vmem, size = 0x8000, scoped, tag = 'input window, operand 4, single buffered']
    #allocation11 [shape = 'u8[32768]{0}', space=vmem, size = 0x8000, scoped, tag = 'input window, operand 6, single buffered']
    #allocation12 [shape = 's32[1]{0}', space=sflag, size = 0x4, scoped, tag = 'scoped memory for tpu_custom_call.1']
    #allocation13 [shape = 'u8[16384]{0}', space=vmem, size = 0x4000, scoped, tag = 'output window, operand 0, single buffered']
    #allocation14 [shape = 'u8[16384]{0}', space=vmem, size = 0x4000, scoped, tag = 'output window, operand 1, single buffered']
    #allocation15 [shape = 's32[1]{0}', space=sflag, size = 0x4, scoped, tag = 'scoped memory for tpu_custom_call.1']
    %16 = vsyncpa [#allocation3], 0
    %17 = vsyncpa [#allocation6], 0
    %18 = vsyncpa [#allocation9], 0
    %19 = vsyncpa [#allocation12], 0
    %20 = vsyncpa [#allocation4], 0
    %21 = vsyncpa [#allocation15], 0
    // Predicated region
    $region2: #{tpu_custom_call.1} parent=1 // pred_check
      _
    $region3: #{tpu_custom_call.1} parent=1 // pred_check_branch
      %23 = sbr.rel (0) target = $region5
    $region4: #{tpu_custom_call.1} parent=1 // pred_region
      %25 = vsyncadd [#allocation3], 0
      %s26 = sshll.u32 %s0, 4
      %s27 = int_to_ptr.hbm [resolvable:$true] %s26
      %s28 = sshll.u32 [#allocation2], 4
      %s29 = int_to_ptr.vmem [resolvable:$true] %s28
      %34 = dma.hbm_to_vmem [thread:$0]  %s27, 1024, %s29, [#allocation3], 256, 256, 16
    $region5: #{tpu_custom_call.1} parent=1 // pred_fallthru
      _
    // Predicated region
    $region6: #{tpu_custom_call.1} parent=1 // pred_check
      _
    $region7: #{tpu_custom_call.1} parent=1 // pred_check_branch
      %36 = sbr.rel (0) target = $region9
    $region8: #{tpu_custom_call.1} parent=1 // pred_region
      %38 = vsyncadd [#allocation6], 0
      %s39 = sshll.u32 %s1, 4
      %s40 = int_to_ptr.hbm [resolvable:$true] %s39
      %s41 = sshll.u32 [#allocation5], 4
      %s42 = int_to_ptr.vmem [resolvable:$true] %s41
      %47 = dma.hbm_to_vmem [thread:$0]  %s40, 4096, %s42, [#allocation6], 128, 128, 8
    $region9: #{tpu_custom_call.1} parent=1 // pred_fallthru
      _
    // Predicated region
    $region10: #{tpu_custom_call.1} parent=1 // pred_check
      _
    $region11: #{tpu_custom_call.1} parent=1 // pred_check_branch
      %49 = sbr.rel (0) target = $region13
    $region12: #{tpu_custom_call.1} parent=1 // pred_region
      %51 = vsyncadd [#allocation6], 0
      %s52 = sshll.u32 %s2, 4
      %s53 = int_to_ptr.hbm [resolvable:$true] %s52
      %s54 = sshll.u32 [#allocation7], 4
      %s55 = int_to_ptr.vmem [resolvable:$true] %s54
      %60 = dma.hbm_to_vmem [thread:$0]  %s53, 512, %s55, [#allocation6], 128, 128, 8
    $region13: #{tpu_custom_call.1} parent=1 // pred_fallthru
      _
    // Predicated region
    $region14: #{tpu_custom_call.1} parent=1 // pred_check
      _
    $region15: #{tpu_custom_call.1} parent=1 // pred_check_branch
      %62 = sbr.rel (0) target = $region17
    $region16: #{tpu_custom_call.1} parent=1 // pred_region
      %64 = vsyncadd [#allocation9], 0
      %s65 = sshll.u32 %s3, 4
      %s66 = int_to_ptr.hbm [resolvable:$true] %s65
      %s67 = sshll.u32 [#allocation8], 4
      %s68 = int_to_ptr.vmem [resolvable:$true] %s67
      %73 = dma.hbm_to_vmem [thread:$0]  %s66, 512, %s68, [#allocation9], 128, 128, 8
    $region17: #{tpu_custom_call.1} parent=1 // pred_fallthru
      _
    // Predicated region
    $region18: #{tpu_custom_call.1} parent=1 // pred_check
      _
    $region19: #{tpu_custom_call.1} parent=1 // pred_check_branch
      %75 = sbr.rel (0) target = $region21
    $region20: #{tpu_custom_call.1} parent=1 // pred_region
      %77 = vsyncadd [#allocation9], 0
      %s78 = sshll.u32 %s4, 4
      %s79 = int_to_ptr.hbm [resolvable:$true] %s78
      %s80 = sshll.u32 [#allocation10], 4
      %s81 = int_to_ptr.vmem [resolvable:$true] %s80
      %86 = dma.hbm_to_vmem [thread:$0]  %s79, 1024, %s81, [#allocation9], 64, 64, 4
    $region21: #{tpu_custom_call.1} parent=1 // pred_fallthru
      _
    // Predicated region
    $region22: #{tpu_custom_call.1} parent=1 // pred_check
      _
    $region23: #{tpu_custom_call.1} parent=1 // pred_check_branch
      %88 = sbr.rel (0) target = $region25
    $region24: #{tpu_custom_call.1} parent=1 // pred_region
      _
    $region25: #{tpu_custom_call.1} parent=1 // pred_fallthru
      _
    // Predicated region
    $region26: #{tpu_custom_call.1} parent=1 // pred_check
      _
    $region27: #{tpu_custom_call.1} parent=1 // pred_check_branch
      %90 = sbr.rel (0) target = $region29
    $region28: #{tpu_custom_call.1} parent=1 // pred_region
      %92 = vsyncadd [#allocation12], 0
      %s93 = sshll.u32 %s6, 4
      %s94 = int_to_ptr.hbm [resolvable:$true] %s93
      %s95 = sshll.u32 [#allocation11], 4
      %s96 = int_to_ptr.vmem [resolvable:$true] %s95
      %101 = dma.hbm_to_vmem [thread:$0]  %s94, 1024, %s96, [#allocation12], 64, 64, 4
    $region29: #{tpu_custom_call.1} parent=1 // pred_fallthru
      _
    // Predicated region
    $region30: #{tpu_custom_call.1} parent=1 // pred_check
      _
    $region31: #{tpu_custom_call.1} parent=1 // pred_check_branch
      %103 = sbr.rel (0) target = $region33
    $region32: #{tpu_custom_call.1} parent=1 // pred_region
      _
    $region33: #{tpu_custom_call.1} parent=1 // pred_fallthru
      _
    // Predicated region
    $region34: #{tpu_custom_call.1} parent=1 // pred_check
      _
    $region35: #{tpu_custom_call.1} parent=1 // pred_check_branch
      %105 = sbr.rel (0) target = $region37
    $region36: #{tpu_custom_call.1} parent=1 // pred_region
      %107 = dma.done [#allocation3], 1024
    $region37: #{tpu_custom_call.1} parent=1 // pred_fallthru
      _
    // Predicated region
    $region38: #{tpu_custom_call.1} parent=1 // pred_check
      _
    $region39: #{tpu_custom_call.1} parent=1 // pred_check_branch
      %109 = sbr.rel (0) target = $region41
    $region40: #{tpu_custom_call.1} parent=1 // pred_region
      %111 = dma.done [#allocation6], 4096
    $region41: #{tpu_custom_call.1} parent=1 // pred_fallthru
      _
    // Predicated region
    $region42: #{tpu_custom_call.1} parent=1 // pred_check
      _
    $region43: #{tpu_custom_call.1} parent=1 // pred_check_branch
      %113 = sbr.rel (0) target = $region45
    $region44: #{tpu_custom_call.1} parent=1 // pred_region
      %115 = dma.done [#allocation6], 512
    $region45: #{tpu_custom_call.1} parent=1 // pred_fallthru
      _
    // Predicated region
    $region46: #{tpu_custom_call.1} parent=1 // pred_check
      _
    $region47: #{tpu_custom_call.1} parent=1 // pred_check_branch
      %117 = sbr.rel (0) target = $region49
    $region48: #{tpu_custom_call.1} parent=1 // pred_region
      %119 = dma.done [#allocation9], 512
    $region49: #{tpu_custom_call.1} parent=1 // pred_fallthru
      _
    // Predicated region
    $region50: #{tpu_custom_call.1} parent=1 // pred_check
      _
    $region51: #{tpu_custom_call.1} parent=1 // pred_check_branch
      %121 = sbr.rel (0) target = $region53
    $region52: #{tpu_custom_call.1} parent=1 // pred_region
      %123 = dma.done [#allocation9], 1024
    $region53: #{tpu_custom_call.1} parent=1 // pred_fallthru
      _
    // Predicated region
    $region54: #{tpu_custom_call.1} parent=1 // pred_check
      _
    $region55: #{tpu_custom_call.1} parent=1 // pred_check_branch
      %125 = sbr.rel (0) target = $region57
    $region56: #{tpu_custom_call.1} parent=1 // pred_region
      %127 = dma.done [#allocation12], 1024
    $region57: #{tpu_custom_call.1} parent=1 // pred_fallthru
      _
    %v128 = vld [vmem:[#allocation2] sm:$0xff]
    %v129 = vld [vmem:[#allocation2 + $0x8] sm:$0xff]
    %v130 = vld [vmem:[#allocation2 + $0x10] sm:$0xff]
    %v131 = vld [vmem:[#allocation2 + $0x18] sm:$0xff]
    %v132 = vld [vmem:[#allocation2 + $0x20] sm:$0xff]
    %v133 = vld [vmem:[#allocation2 + $0x28] sm:$0xff]
    %v134 = vld [vmem:[#allocation2 + $0x30] sm:$0xff]
    %v135 = vld [vmem:[#allocation2 + $0x38] sm:$0xff]
    %v136 = vld [vmem:[#allocation5] sm:$0xff]
    %v137 = vld [vmem:[#allocation5 + $0x8] sm:$0xff]
    %v138 = vld [vmem:[#allocation5 + $0x10] sm:$0xff]
    %v139 = vld [vmem:[#allocation5 + $0x18] sm:$0xff]
    %v140 = vld [vmem:[#allocation5 + $0x20] sm:$0xff]
    %v141 = vld [vmem:[#allocation5 + $0x28] sm:$0xff]
    %v142 = vld [vmem:[#allocation5 + $0x30] sm:$0xff]
    %v143 = vld [vmem:[#allocation5 + $0x38] sm:$0xff]
    %v144 = vld [vmem:[#allocation5 + $0x40] sm:$0xff]
    %v145 = vld [vmem:[#allocation5 + $0x48] sm:$0xff]
    %v146 = vld [vmem:[#allocation5 + $0x50] sm:$0xff]
    %v147 = vld [vmem:[#allocation5 + $0x58] sm:$0xff]
    %v148 = vld [vmem:[#allocation5 + $0x60] sm:$0xff]
    %v149 = vld [vmem:[#allocation5 + $0x68] sm:$0xff]
    %v150 = vld [vmem:[#allocation5 + $0x70] sm:$0xff]
    %v151 = vld [vmem:[#allocation5 + $0x78] sm:$0xff]
    %v152 = vld [vmem:[#allocation5 + $0x80] sm:$0xff]
    %v153 = vld [vmem:[#allocation5 + $0x88] sm:$0xff]
    %v154 = vld [vmem:[#allocation5 + $0x90] sm:$0xff]
    %v155 = vld [vmem:[#allocation5 + $0x98] sm:$0xff]
    %v156 = vld [vmem:[#allocation5 + $0xa0] sm:$0xff]
    %v157 = vld [vmem:[#allocation5 + $0xa8] sm:$0xff]
    %v158 = vld [vmem:[#allocation5 + $0xb0] sm:$0xff]
    %v159 = vld [vmem:[#allocation5 + $0xb8] sm:$0xff]
    %v160 = vld [vmem:[#allocation5 + $0xc0] sm:$0xff]
    %v161 = vld [vmem:[#allocation5 + $0xc8] sm:$0xff]
    %v162 = vld [vmem:[#allocation5 + $0xd0] sm:$0xff]
    %v163 = vld [vmem:[#allocation5 + $0xd8] sm:$0xff]
    %v164 = vld [vmem:[#allocation5 + $0xe0] sm:$0xff]
    %v165 = vld [vmem:[#allocation5 + $0xe8] sm:$0xff]
    %v166 = vld [vmem:[#allocation5 + $0xf0] sm:$0xff]
    %v167 = vld [vmem:[#allocation5 + $0xf8] sm:$0xff]
    %v168 = vld [vmem:[#allocation7] sm:$0xff]
    %v169 = vld [vmem:[#allocation7 + $0x8] sm:$0xff]
    %v170 = vld [vmem:[#allocation7 + $0x10] sm:$0xff]
    %v171 = vld [vmem:[#allocation7 + $0x18] sm:$0xff]
    %172 = vmatpush.msra.mxu0 %v151
    %173 = vmatpush.msra.mxu0 %v150
    %174 = vmatpush.msra.mxu0 %v149
    %175 = vmatpush.msra.mxu0 %v148
    %176 = vmatpush.msra.mxu0 %v147
    %177 = vmatpush.msra.mxu0 %v146
    %178 = vmatpush.msra.mxu0 %v145
    %179 = vmatpush.msra.mxu0 %v144
    %180 = vmatpush.msra.mxu0 %v143
    %181 = vmatpush.msra.mxu0 %v142
    %182 = vmatpush.msra.mxu0 %v141
    %183 = vmatpush.msra.mxu0 %v140
    %184 = vmatpush.msra.mxu0 %v139
    %185 = vmatpush.msra.mxu0 %v138
    %186 = vmatpush.msra.mxu0 %v137
    %187 = vmatpush.msra.mxu0 %v136
    %188 = vmatmul.f32.gmra.mxu0 %v128
    %v189 = vpop.f32.mrf.mxu0
    %v190 = vadd.f32 %v168, %v189
    %191 = vmatmul.f32.gmra.mxu0 %v130
    %v192 = vpop.f32.mrf.mxu0
    %v193 = vadd.f32 %v169, %v192
    %194 = vmatmul.f32.gmra.mxu0 %v132
    %v195 = vpop.f32.mrf.mxu0
    %v196 = vadd.f32 %v170, %v195
    %197 = vmatmul.f32.gmra.mxu0 %v134
    %v198 = vpop.f32.mrf.mxu0
    %v199 = vadd.f32 %v171, %v198
    %200 = vdwg.mxu0
    %201 = vmatpush.msra.mxu0 %v167
    %202 = vmatpush.msra.mxu0 %v166
    %203 = vmatpush.msra.mxu0 %v165
    %204 = vmatpush.msra.mxu0 %v164
    %205 = vmatpush.msra.mxu0 %v163
    %206 = vmatpush.msra.mxu0 %v162
    %207 = vmatpush.msra.mxu0 %v161
    %208 = vmatpush.msra.mxu0 %v160
    %209 = vmatpush.msra.mxu0 %v159
    %210 = vmatpush.msra.mxu0 %v158
    %211 = vmatpush.msra.mxu0 %v157
    %212 = vmatpush.msra.mxu0 %v156
    %213 = vmatpush.msra.mxu0 %v155
    %214 = vmatpush.msra.mxu0 %v154
    %215 = vmatpush.msra.mxu0 %v153
    %216 = vmatpush.msra.mxu0 %v152
    %217 = vmatmul.f32.gmra.mxu0 %v129
    %v218 = vpop.f32.mrf.mxu0
    %v219 = vadd.f32 %v190, %v218
    %220 = vmatmul.f32.gmra.mxu0 %v131
    %v221 = vpop.f32.mrf.mxu0
    %v222 = vadd.f32 %v193, %v221
    %223 = vmatmul.f32.gmra.mxu0 %v133
    %v224 = vpop.f32.mrf.mxu0
    %v225 = vadd.f32 %v196, %v224
    %226 = vmatmul.f32.gmra.mxu0 %v135
    %v227 = vpop.f32.mrf.mxu0
    %v228 = vadd.f32 %v199, %v227
    %229 = vdwg.mxu0
    %230 = vst [vmem:[#allocation13] sm:$0xff] %v219
    %231 = vst [vmem:[#allocation13 + $0x8] sm:$0xff] %v222
    %232 = vst [vmem:[#allocation13 + $0x10] sm:$0xff] %v225
    %233 = vst [vmem:[#allocation13 + $0x18] sm:$0xff] %v228
    %v234 = vld [vmem:[#allocation8] sm:$0xff]
    %v235 = vld [vmem:[#allocation8 + $0x8] sm:$0xff]
    %v236 = vld [vmem:[#allocation8 + $0x10] sm:$0xff]
    %v237 = vld [vmem:[#allocation8 + $0x18] sm:$0xff]
    %vm238 = vcmask 261120
    %v240 = vsel %vm238, %v234, 0
    %v243 = vsel %vm238, %v235, 0
    %v246 = vsel %vm238, %v236, 0
    %v249 = vsel %vm238, %v237, 0
    %251 = vmatpush.msra.mxu0 0.0
    %252 = vmatpush.msra.mxu0 0.0
    %253 = vmatpush.msra.mxu0 0.0
    %254 = vmatpush.msra.mxu0 0.0
    %255 = vmatpush.msra.mxu0 0.0
    %256 = vmatpush.msra.mxu0 0.0
    %257 = vmatpush.msra.mxu0 0.0
    %258 = vmatpush.msra.mxu0 0.0
    %259 = vmatpush.msra.mxu0 0.0
    %260 = vmatpush.msra.mxu0 0.0
    %261 = vmatpush.msra.mxu0 0.0
    %262 = vmatpush.msra.mxu0 0.0
    %263 = vmatpush.msra.mxu0 %v228
    %264 = vmatpush.msra.mxu0 %v225
    %265 = vmatpush.msra.mxu0 %v222
    %266 = vmatpush.msra.mxu0 %v219
    %267 = vmatmul.f32.gmra.mxu0 %v240
    %v268 = vpop.f32.mrf.mxu0
    %v269 = vadd.f32 0.0, %v268
    %270 = vmatmul.f32.gmra.mxu0 %v243
    %v271 = vpop.f32.mrf.mxu0
    %v272 = vadd.f32 0.0, %v271
    %273 = vmatmul.f32.gmra.mxu0 %v246
    %v274 = vpop.f32.mrf.mxu0
    %v275 = vadd.f32 0.0, %v274
    %276 = vmatmul.f32.gmra.mxu0 %v249
    %v277 = vpop.f32.mrf.mxu0
    %v278 = vadd.f32 0.0, %v277
    %279 = vdwg.mxu0
    %v280 = vmul.f32 %v219, %v219
    %v281 = vmul.f32 %v222, %v222
    %v282 = vmul.f32 %v225, %v225
    %v283 = vmul.f32 %v228, %v228
    %284 = vmatpush.msra.mxu0 0.0
    %285 = vmatpush.msra.mxu0 0.0
    %286 = vmatpush.msra.mxu0 0.0
    %287 = vmatpush.msra.mxu0 0.0
    %288 = vmatpush.msra.mxu0 0.0
    %289 = vmatpush.msra.mxu0 0.0
    %290 = vmatpush.msra.mxu0 0.0
    %291 = vmatpush.msra.mxu0 0.0
    %292 = vmatpush.msra.mxu0 0.0
    %293 = vmatpush.msra.mxu0 0.0
    %294 = vmatpush.msra.mxu0 0.0
    %295 = vmatpush.msra.mxu0 0.0
    %296 = vmatpush.msra.mxu0 %v283
    %297 = vmatpush.msra.mxu0 %v282
    %298 = vmatpush.msra.mxu0 %v281
    %299 = vmatpush.msra.mxu0 %v280
    %300 = vmatmul.f32.gmra.mxu0 %v240
    %v301 = vpop.f32.mrf.mxu0
    %v302 = vadd.f32 0.0, %v301
    %303 = vmatmul.f32.gmra.mxu0 %v243
    %v304 = vpop.f32.mrf.mxu0
    %v305 = vadd.f32 0.0, %v304
    %306 = vmatmul.f32.gmra.mxu0 %v246
    %v307 = vpop.f32.mrf.mxu0
    %v308 = vadd.f32 0.0, %v307
    %309 = vmatmul.f32.gmra.mxu0 %v249
    %v310 = vpop.f32.mrf.mxu0
    %v311 = vadd.f32 0.0, %v310
    %312 = vdwg.mxu0
    %v313 = vmul.f32 %v269, %v269
    %v314 = vmul.f32 %v272, %v272
    %v315 = vmul.f32 %v275, %v275
    %v316 = vmul.f32 %v278, %v278
    %v317 = vsub.f32 %v302, %v313
    %v318 = vsub.f32 %v305, %v314
    %v319 = vsub.f32 %v308, %v315
    %v320 = vsub.f32 %v311, %v316
    %321 = vadd.xlane.f32.xlu0 %v317
    %v322 = vpop.xlane.xlu0 %321
    %323 = vadd.xlane.f32.xlu0 %v318
    %v324 = vpop.xlane.xlu0 %323
    %325 = vadd.xlane.f32.xlu0 %v319
    %v326 = vpop.xlane.xlu0 %325
    %327 = vadd.xlane.f32.xlu0 %v320
    %v328 = vpop.xlane.xlu0 %327
    %329 = vadd.xlane.f32.xlu0 %v269
    %v330 = vpop.xlane.xlu0 %329
    %331 = vadd.xlane.f32.xlu0 %v272
    %v332 = vpop.xlane.xlu0 %331
    %333 = vadd.xlane.f32.xlu0 %v275
    %v334 = vpop.xlane.xlu0 %333
    %335 = vadd.xlane.f32.xlu0 %v278
    %v336 = vpop.xlane.xlu0 %335
    %v337 = vadd.f32 %v330, 1e-06
    %v338 = vadd.f32 %v332, 1e-06
    %v339 = vadd.f32 %v334, 1e-06
    %v340 = vadd.f32 %v336, 1e-06
    %v341 = vrcp.pop %v337
    %v342 = vmul.f32 %v337, %v341
    %v343 = vsub.f32 1.0, %v342
    %v344 = vmul.f32 %v341, %v343
    %v345 = vadd.f32 %v341, %v344
    %vm346 = vweird.f32 %v337
    %vm347 = vweird.f32 %v341
    %vm348 = vmor %vm346, %vm347
    %v349 = vsel %vm348, %v341, %v345
    %v350 = vand.u32 2147483647, %v337
    %vm351 = vcmp.eq.f32.partialorder %v350, 8.507059e+37
    %v352 = vand.u32 %v337, 2147483648
    %v353 = vor.u32 1.1754944e-38, %v352
    %v354 = vsel %vm351, %v353, %v349
    %v355 = vmul.f32 %v322, %v354
    %v356 = vrcp.pop %v338
    %v357 = vmul.f32 %v338, %v356
    %v358 = vsub.f32 1.0, %v357
    %v359 = vmul.f32 %v356, %v358
    %v360 = vadd.f32 %v356, %v359
    %vm361 = vweird.f32 %v338
    %vm362 = vweird.f32 %v356
    %vm363 = vmor %vm361, %vm362
    %v364 = vsel %vm363, %v356, %v360
    %v365 = vand.u32 2147483647, %v338
    %vm366 = vcmp.eq.f32.partialorder %v365, 8.507059e+37
    %v367 = vand.u32 %v338, 2147483648
    %v368 = vor.u32 1.1754944e-38, %v367
    %v369 = vsel %vm366, %v368, %v364
    %v370 = vmul.f32 %v324, %v369
    %v371 = vrcp.pop %v339
    %v372 = vmul.f32 %v339, %v371
    %v373 = vsub.f32 1.0, %v372
    %v374 = vmul.f32 %v371, %v373
    %v375 = vadd.f32 %v371, %v374
    %vm376 = vweird.f32 %v339
    %vm377 = vweird.f32 %v371
    %vm378 = vmor %vm376, %vm377
    %v379 = vsel %vm378, %v371, %v375
    %v380 = vand.u32 2147483647, %v339
    %vm381 = vcmp.eq.f32.partialorder %v380, 8.507059e+37
    %v382 = vand.u32 %v339, 2147483648
    %v383 = vor.u32 1.1754944e-38, %v382
    %v384 = vsel %vm381, %v383, %v379
    %v385 = vmul.f32 %v326, %v384
    %v386 = vrcp.pop %v340
    %v387 = vmul.f32 %v340, %v386
    %v388 = vsub.f32 1.0, %v387
    %v389 = vmul.f32 %v386, %v388
    %v390 = vadd.f32 %v386, %v389
    %vm391 = vweird.f32 %v340
    %vm392 = vweird.f32 %v386
    %vm393 = vmor %vm391, %vm392
    %v394 = vsel %vm393, %v386, %v390
    %v395 = vand.u32 2147483647, %v340
    %vm396 = vcmp.eq.f32.partialorder %v395, 8.507059e+37
    %v397 = vand.u32 %v340, 2147483648
    %v398 = vor.u32 1.1754944e-38, %v397
    %v399 = vsel %vm396, %v398, %v394
    %v400 = vmul.f32 %v328, %v399
    %vm401 = vcmask 7168
    %402 = vst.msk [vmem:[%s10] sm:$0xff] %vm401, %v355
    %403 = vst.msk [vmem:[%s10 + $0x8] sm:$0xff] %vm401, %v370
    %404 = vst.msk [vmem:[%s10 + $0x10] sm:$0xff] %vm401, %v385
    %405 = vst.msk [vmem:[%s10 + $0x18] sm:$0xff] %vm401, %v400
    %v406 = vpack.c.bf16 %v222, %v219
    %v407 = vpack.c.bf16 %v228, %v225
    %v408 = vld [vmem:[#allocation10] sm:$0xf]
    %v409 = vld [vmem:[#allocation10 + $0x4] sm:$0xf]
    %v410 = vld [vmem:[#allocation10 + $0x8] sm:$0xf]
    %v411 = vld [vmem:[#allocation10 + $0xc] sm:$0xf]
    %v412 = vld [vmem:[#allocation10 + $0x10] sm:$0xf]
    %v413 = vld [vmem:[#allocation10 + $0x14] sm:$0xf]
    %v414 = vld [vmem:[#allocation10 + $0x18] sm:$0xf]
    %v415 = vld [vmem:[#allocation10 + $0x1c] sm:$0xf]
    %v416 = vld [vmem:[#allocation10 + $0x20] sm:$0xf]
    %v417 = vld [vmem:[#allocation10 + $0x24] sm:$0xf]
    %v418 = vld [vmem:[#allocation10 + $0x28] sm:$0xf]
    %v419 = vld [vmem:[#allocation10 + $0x2c] sm:$0xf]
    %v420 = vld [vmem:[#allocation10 + $0x30] sm:$0xf]
    %v421 = vld [vmem:[#allocation10 + $0x34] sm:$0xf]
    %v422 = vld [vmem:[#allocation10 + $0x38] sm:$0xf]
    %v423 = vld [vmem:[#allocation10 + $0x3c] sm:$0xf]
    %v424 = vld [vmem:[%s5] sm:$0x1]
    %v426 = vperm.slane %v424, 0
    %v444 = vunpack.c.l.b16 %v408
    %v445 = vunpack.c.l.b16 %v409
    %v446 = vunpack.c.l.b16 %v410
    %v447 = vunpack.c.l.b16 %v411
    %v448 = vunpack.c.l.b16 %v412
    %v449 = vunpack.c.l.b16 %v413
    %v450 = vunpack.c.l.b16 %v414
    %v451 = vunpack.c.l.b16 %v415
    %v452 = vunpack.c.l.b16 %v416
    %v453 = vunpack.c.l.b16 %v417
    %v454 = vunpack.c.l.b16 %v418
    %v455 = vunpack.c.l.b16 %v419
    %v456 = vunpack.c.l.b16 %v420
    %v457 = vunpack.c.l.b16 %v421
    %v458 = vunpack.c.l.b16 %v422
    %v459 = vunpack.c.l.b16 %v423
    %v460 = vpack.c.b16 %v445, %v444
    %v461 = vpack.c.b16 %v447, %v446
    %v462 = vpack.c.b16 %v449, %v448
    %v463 = vpack.c.b16 %v451, %v450
    %v464 = vpack.c.b16 %v453, %v452
    %v465 = vpack.c.b16 %v455, %v454
    %v466 = vpack.c.b16 %v457, %v456
    %v467 = vpack.c.b16 %v459, %v458
    %476 = vmatpush.bf16.msra.mxu0 %v467
    %477 = vmatpush.bf16.msra.mxu0 %v466
    %478 = vmatpush.bf16.msra.mxu0 %v465
    %479 = vmatpush.bf16.msra.mxu0 %v464
    %480 = vmatpush.bf16.msra.mxu0 %v463
    %481 = vmatpush.bf16.msra.mxu0 %v462
    %482 = vmatpush.bf16.msra.mxu0 %v461
    %483 = vmatpush.bf16.msra.mxu0 %v460
    %484 = vmatmul.bf16.gmra.mxu0 %v406
    %v485 = vpop.f32.mrf.mxu0
    %v486 = vadd.f32 %v426, %v485
    %v487 = vpop.f32.mrf.mxu0
    %v488 = vadd.f32 %v426, %v487
    %489 = vmatmul.bf16.gmra.mxu0 %v407
    %v490 = vpop.f32.mrf.mxu0
    %v491 = vadd.f32 %v426, %v490
    %v492 = vpop.f32.mrf.mxu0
    %v493 = vadd.f32 %v426, %v492
    %494 = vdwg.mxu0
    %v495 = vmul.f32 %v486, %v486
    %v496 = vmul.f32 %v488, %v488
    %v497 = vmul.f32 %v491, %v491
    %v498 = vmul.f32 %v493, %v493
    %v499 = vmul.f32 %v486, %v495
    %v500 = vmul.f32 %v488, %v496
    %v501 = vmul.f32 %v491, %v497
    %v502 = vmul.f32 %v493, %v498
    %v503 = vmul.f32 %v499, 0.044715
    %v504 = vmul.f32 %v500, 0.044715
    %v505 = vmul.f32 %v501, 0.044715
    %v506 = vmul.f32 %v502, 0.044715
    %v507 = vadd.f32 %v486, %v503
    %v508 = vadd.f32 %v488, %v504
    %v509 = vadd.f32 %v491, %v505
    %v510 = vadd.f32 %v493, %v506
    %v511 = vmul.f32 %v507, 0.7978846
    %v512 = vmul.f32 %v508, 0.7978846
    %v513 = vmul.f32 %v509, 0.7978846
    %v514 = vmul.f32 %v510, 0.7978846
    %v515 = vtanh.pop %v511
    %v516 = vtanh.pop %v512
    %v517 = vtanh.pop %v513
    %v518 = vtanh.pop %v514
    %v519 = vadd.f32 %v515, 1.0
    %v520 = vadd.f32 %v516, 1.0
    %v521 = vadd.f32 %v517, 1.0
    %v522 = vadd.f32 %v518, 1.0
    %v523 = vmul.f32 %v519, 0.5
    %v524 = vmul.f32 %v520, 0.5
    %v525 = vmul.f32 %v521, 0.5
    %v526 = vmul.f32 %v522, 0.5
    %v527 = vmul.f32 %v486, %v523
    %v528 = vmul.f32 %v488, %v524
    %v529 = vmul.f32 %v491, %v525
    %v530 = vmul.f32 %v493, %v526
    %v531 = vpack.c.bf16 %v528, %v527
    %v532 = vpack.c.bf16 %v530, %v529
    %v533 = vld [vmem:[#allocation11] sm:$0xf]
    %v534 = vld [vmem:[#allocation11 + $0x4] sm:$0xf]
    %v535 = vld [vmem:[#allocation11 + $0x8] sm:$0xf]
    %v536 = vld [vmem:[#allocation11 + $0xc] sm:$0xf]
    %v537 = vld [vmem:[#allocation11 + $0x10] sm:$0xf]
    %v538 = vld [vmem:[#allocation11 + $0x14] sm:$0xf]
    %v539 = vld [vmem:[#allocation11 + $0x18] sm:$0xf]
    %v540 = vld [vmem:[#allocation11 + $0x1c] sm:$0xf]
    %v541 = vld [vmem:[#allocation11 + $0x20] sm:$0xf]
    %v542 = vld [vmem:[#allocation11 + $0x24] sm:$0xf]
    %v543 = vld [vmem:[#allocation11 + $0x28] sm:$0xf]
    %v544 = vld [vmem:[#allocation11 + $0x2c] sm:$0xf]
    %v545 = vld [vmem:[#allocation11 + $0x30] sm:$0xf]
    %v546 = vld [vmem:[#allocation11 + $0x34] sm:$0xf]
    %v547 = vld [vmem:[#allocation11 + $0x38] sm:$0xf]
    %v548 = vld [vmem:[#allocation11 + $0x3c] sm:$0xf]
    %v549 = vld [vmem:[%s7] sm:$0x1]
    %v551 = vperm.slane %v549, 0
    %v569 = vunpack.c.l.b16 %v533
    %v570 = vunpack.c.l.b16 %v534
    %v571 = vunpack.c.l.b16 %v535
    %v572 = vunpack.c.l.b16 %v536
    %v573 = vunpack.c.l.b16 %v537
    %v574 = vunpack.c.l.b16 %v538
    %v575 = vunpack.c.l.b16 %v539
    %v576 = vunpack.c.l.b16 %v540
    %v577 = vunpack.c.l.b16 %v541
    %v578 = vunpack.c.l.b16 %v542
    %v579 = vunpack.c.l.b16 %v543
    %v580 = vunpack.c.l.b16 %v544
    %v581 = vunpack.c.l.b16 %v545
    %v582 = vunpack.c.l.b16 %v546
    %v583 = vunpack.c.l.b16 %v547
    %v584 = vunpack.c.l.b16 %v548
    %v585 = vpack.c.b16 %v570, %v569
    %v586 = vpack.c.b16 %v572, %v571
    %v587 = vpack.c.b16 %v574, %v573
    %v588 = vpack.c.b16 %v576, %v575
    %v589 = vpack.c.b16 %v578, %v577
    %v590 = vpack.c.b16 %v580, %v579
    %v591 = vpack.c.b16 %v582, %v581
    %v592 = vpack.c.b16 %v584, %v583
    %601 = vmatpush.bf16.msra.mxu0 %v592
    %602 = vmatpush.bf16.msra.mxu0 %v591
    %603 = vmatpush.bf16.msra.mxu0 %v590
    %604 = vmatpush.bf16.msra.mxu0 %v589
    %605 = vmatpush.bf16.msra.mxu0 %v588
    %606 = vmatpush.bf16.msra.mxu0 %v587
    %607 = vmatpush.bf16.msra.mxu0 %v586
    %608 = vmatpush.bf16.msra.mxu0 %v585
    %609 = vmatmul.bf16.gmra.mxu0 %v531
    %v610 = vpop.f32.mrf.mxu0
    %v611 = vadd.f32 %v551, %v610
    %v612 = vpop.f32.mrf.mxu0
    %v613 = vadd.f32 %v551, %v612
    %614 = vmatmul.bf16.gmra.mxu0 %v532
    %v615 = vpop.f32.mrf.mxu0
    %v616 = vadd.f32 %v551, %v615
    %v617 = vpop.f32.mrf.mxu0
    %v618 = vadd.f32 %v551, %v617
    %619 = vdwg.mxu0
    %v620 = vxor.u32 %v611, 2147483648
    %v621 = vxor.u32 %v613, 2147483648
    %v622 = vxor.u32 %v616, 2147483648
    %v623 = vxor.u32 %v618, 2147483648
    %v624 = vmul.f32 %v620, 1.442695
    %v625 = vpow.pop %v624
    %v626 = vmul.f32 %v621, 1.442695
    %v627 = vpow.pop %v626
    %v628 = vmul.f32 %v622, 1.442695
    %v629 = vpow.pop %v628
    %v630 = vmul.f32 %v623, 1.442695
    %v631 = vpow.pop %v630
    %v632 = vadd.f32 %v625, 1.0
    %v633 = vadd.f32 %v627, 1.0
    %v634 = vadd.f32 %v629, 1.0
    %v635 = vadd.f32 %v631, 1.0
    %v636 = vrcp.pop %v632
    %v637 = vmul.f32 %v632, %v636
    %v638 = vsub.f32 1.0, %v637
    %v639 = vmul.f32 %v636, %v638
    %v640 = vadd.f32 %v636, %v639
    %vm641 = vweird.f32 %v632
    %vm642 = vweird.f32 %v636
    %vm643 = vmor %vm641, %vm642
    %v644 = vsel %vm643, %v636, %v640
    %v645 = vand.u32 2147483647, %v632
    %vm646 = vcmp.eq.f32.partialorder %v645, 8.507059e+37
    %v647 = vand.u32 %v632, 2147483648
    %v648 = vor.u32 1.1754944e-38, %v647
    %v649 = vsel %vm646, %v648, %v644
    %v650 = vmul.f32 1.0, %v649
    %v651 = vrcp.pop %v633
    %v652 = vmul.f32 %v633, %v651
    %v653 = vsub.f32 1.0, %v652
    %v654 = vmul.f32 %v651, %v653
    %v655 = vadd.f32 %v651, %v654
    %vm656 = vweird.f32 %v633
    %vm657 = vweird.f32 %v651
    %vm658 = vmor %vm656, %vm657
    %v659 = vsel %vm658, %v651, %v655
    %v660 = vand.u32 2147483647, %v633
    %vm661 = vcmp.eq.f32.partialorder %v660, 8.507059e+37
    %v662 = vand.u32 %v633, 2147483648
    %v663 = vor.u32 1.1754944e-38, %v662
    %v664 = vsel %vm661, %v663, %v659
    %v665 = vmul.f32 1.0, %v664
    %v666 = vrcp.pop %v634
    %v667 = vmul.f32 %v634, %v666
    %v668 = vsub.f32 1.0, %v667
    %v669 = vmul.f32 %v666, %v668
    %v670 = vadd.f32 %v666, %v669
    %vm671 = vweird.f32 %v634
    %vm672 = vweird.f32 %v666
    %vm673 = vmor %vm671, %vm672
    %v674 = vsel %vm673, %v666, %v670
    %v675 = vand.u32 2147483647, %v634
    %vm676 = vcmp.eq.f32.partialorder %v675, 8.507059e+37
    %v677 = vand.u32 %v634, 2147483648
    %v678 = vor.u32 1.1754944e-38, %v677
    %v679 = vsel %vm676, %v678, %v674
    %v680 = vmul.f32 1.0, %v679
    %v681 = vrcp.pop %v635
    %v682 = vmul.f32 %v635, %v681
    %v683 = vsub.f32 1.0, %v682
    %v684 = vmul.f32 %v681, %v683
    %v685 = vadd.f32 %v681, %v684
    %vm686 = vweird.f32 %v635
    %vm687 = vweird.f32 %v681
    %vm688 = vmor %vm686, %vm687
    %v689 = vsel %vm688, %v681, %v685
    %v690 = vand.u32 2147483647, %v635
    %vm691 = vcmp.eq.f32.partialorder %v690, 8.507059e+37
    %v692 = vand.u32 %v635, 2147483648
    %v693 = vor.u32 1.1754944e-38, %v692
    %v694 = vsel %vm691, %v693, %v689
    %v695 = vmul.f32 1.0, %v694
    %696 = vst [vmem:[#allocation14] sm:$0xff] %v650
    %697 = vst [vmem:[#allocation14 + $0x8] sm:$0xff] %v665
    %698 = vst [vmem:[#allocation14 + $0x10] sm:$0xff] %v680
    %699 = vst [vmem:[#allocation14 + $0x18] sm:$0xff] %v695
    // Predicated region
    $region58: #{tpu_custom_call.1} parent=1 // pred_check
      _
    $region59: #{tpu_custom_call.1} parent=1 // pred_check_branch
      %701 = sbr.rel (0) target = $region61
    $region60: #{tpu_custom_call.1} parent=1 // pred_region
      %703 = vsyncadd [#allocation4], 0
      %s704 = sshll.u32 [#allocation13], 4
      %s705 = int_to_ptr.vmem [resolvable:$true] %s704
      %s706 = sshll.u32 %s8, 4
      %s707 = int_to_ptr.hbm [resolvable:$true] %s706
      %712 = dma.vmem_to_hbm [thread:$0]  %s705, 512, %s707, [#allocation4], 128, 128, 8
    $region61: #{tpu_custom_call.1} parent=1 // pred_fallthru
      _
    // Predicated region
    $region62: #{tpu_custom_call.1} parent=1 // pred_check
      _
    $region63: #{tpu_custom_call.1} parent=1 // pred_check_branch
      %714 = sbr.rel (0) target = $region65
    $region64: #{tpu_custom_call.1} parent=1 // pred_region
      %716 = vsyncadd [#allocation15], 0
      %s717 = sshll.u32 [#allocation14], 4
      %s718 = int_to_ptr.vmem [resolvable:$true] %s717
      %s719 = sshll.u32 %s9, 4
      %s720 = int_to_ptr.hbm [resolvable:$true] %s719
      %725 = dma.vmem_to_hbm [thread:$0]  %s718, 512, %s720, [#allocation15], 128, 128, 8
    $region65: #{tpu_custom_call.1} parent=1 // pred_fallthru
      _
    // Predicated region
    $region66: #{tpu_custom_call.1} parent=1 // pred_check
      _
    $region67: #{tpu_custom_call.1} parent=1 // pred_check_branch
      %727 = sbr.rel (0) target = $region69
    $region68: #{tpu_custom_call.1} parent=1 // pred_region
      _
    $region69: #{tpu_custom_call.1} parent=1 // pred_fallthru
      _
    // Predicated region
    $region70: #{tpu_custom_call.1} parent=1 // pred_check
      _
    $region71: #{tpu_custom_call.1} parent=1 // pred_check_branch
      %729 = sbr.rel (0) target = $region73
    $region72: #{tpu_custom_call.1} parent=1 // pred_region
      %731 = dma.done [#allocation4], 512
    $region73: #{tpu_custom_call.1} parent=1 // pred_fallthru
      _
    // Predicated region
    $region74: #{tpu_custom_call.1} parent=1 // pred_check
      _
    $region75: #{tpu_custom_call.1} parent=1 // pred_check_branch
      %733 = sbr.rel (0) target = $region77
    $region76: #{tpu_custom_call.1} parent=1 // pred_region
      %735 = dma.done [#allocation15], 512
    $region77: #{tpu_custom_call.1} parent=1 // pred_fallthru
      _
    // Predicated region
    $region78: #{tpu_custom_call.1} parent=1 // pred_check
      _
    $region79: #{tpu_custom_call.1} parent=1 // pred_check_branch
      %737 = sbr.rel (0) target = $region81
    $region80: #{tpu_custom_call.1} parent=1 // pred_region
      _
    $region81: #{tpu_custom_call.1} parent=1 // pred_fallthru
      _
    %738 = vsyncpa [#allocation3], 1
    %739 = vsyncpa [#allocation6], 1
    %740 = vsyncpa [#allocation9], 1
    %741 = vsyncpa [#allocation12], 1
    %742 = vsyncpa [#allocation4], 1
    %743 = vsyncpa [#allocation15], 1

</llo_original>
